<compile_context>
chip_gen: v7x
topology: tpu7x:2x2x1
jax: 0.10.0
libtpu: 0.0.40
codegen_flags: <defaults>
</compile_context>

<pallas_src>
import jax
import jax.numpy as jnp
from jax.experimental import pallas as pl
from jax.experimental.pallas import tpu as pltpu

EDGE_PRIMITIVES = ["edge_add", "edge_drop", "edge_rewire", "edge_keep"]

# ~4 MiB per input tile: with default double-buffering this stays well inside the
# smallest scoped-VMEM default (16 MiB on v5e; 32 MiB on v6e/v7x).
_VMEM_TILE_BUDGET = 4 << 20


def _pick_tile(n, row_bytes, budget=_VMEM_TILE_BUDGET, align=8):
    """Largest divisor t of n with t*row_bytes <= budget.  t == n (full dim) is always a
    legal block dim; otherwise t must be a multiple of `align` (sublane constraint when
    the dim lands in the last-two positions of a block)."""
    if n * row_bytes <= budget:
        return n
    cap = max(1, budget // max(1, row_bytes))
    for t in range(min(n, cap), 0, -1):
        if n % t == 0 and t % align == 0:
            return t
    return n  # no aligned divisor fits the budget: fall back to one whole-dim block


# --------------------------------------------------------------------------
# Kernel 1 (edge mix): per-primitive running max over S (degenerate CNN path)
#                      + alpha-weighted mixture  ->  C (L, D)
# grid = (L/TL "parallel", S/TS "arbitrary"); running-max accumulator in scratch.
# --------------------------------------------------------------------------
def _edge_mix_kernel(alphas_ref, ops_ref, c_ref, m_acc):
    s_idx = pl.program_id(1)

    @pl.when(s_idx == 0)
    def _():
        m_acc[...] = jnp.full_like(m_acc, -jnp.inf)

    # Cast right after load: bf16 inputs halve HBM traffic but v5e has no bf16 VPU,
    # so the max/mix arithmetic runs in f32 on every chip.
    t = ops_ref[...].astype(jnp.float32)                       # (TL, P, TS, D)
    m_acc[...] = jnp.maximum(m_acc[...], jnp.max(t, axis=2))   # (TL, P, D)

    @pl.when(s_idx == pl.num_programs(1) - 1)
    def _():
        # alpha mix: (TL, P, D) * (P, 1) broadcast, reduce over primitives.
        c_ref[...] = jnp.sum(m_acc[...] * alphas_ref[...], axis=1)   # (TL, D)


def edge_mix_forward(edge_alphas, op_tensors):
    """edge_alphas: (P,) f32, op_tensors: (L, P, S, D) f32/bf16 -> C: (L, D) f32."""
    L, P, S, D = op_tensors.shape
    itemsize = op_tensors.dtype.itemsize
    ts = _pick_tile(S, P * D * itemsize)            # keep full S per L-row when it fits
    tl = _pick_tile(L, P * ts * D * itemsize)
    grid = (L // tl, S // ts)
    return pl.pallas_call(
        _edge_mix_kernel,
        out_shape=jax.ShapeDtypeStruct((L, D), jnp.float32),
        grid=grid,
        in_specs=[
            pl.BlockSpec((P, 1), lambda i, s: (0, 0)),                 # alphas (resident)
            pl.BlockSpec((tl, P, ts, D), lambda i, s: (i, 0, s, 0)),   # op_tensors tile
        ],
        out_specs=pl.BlockSpec((tl, D), lambda i, s: (i, 0)),
        scratch_shapes=[pltpu.VMEM((tl, P, D), jnp.float32)],
        compiler_params=pltpu.CompilerParams(
            dimension_semantics=("parallel", "arbitrary")),            # L across TCs (v7x)
    )(edge_alphas.reshape(P, 1), op_tensors)


# --------------------------------------------------------------------------
# Kernel 2 (discriminator): one (L,D)x(D,D) matmul, one-hot perm gather on the
#                           MXU, rowwise bilinear pos/neg scores.
# --------------------------------------------------------------------------
def _edge_disc_kernel(c_ref, orig_ref, w_ref, perm_ref, b_ref, out_ref):
    L, _ = c_ref.shape
    c = c_ref[...]                                              # (L, D)
    orig = orig_ref[...]                                        # (L, D)
    # Single matmul; negatives reuse it since (C[perm]) @ W == (C @ W)[perm].
    cw = jnp.dot(c, w_ref[...], preferred_element_type=jnp.float32)       # (L, D)
    # Gather cw[perm] via a one-hot permutation matrix (no per-row dynamic slices,
    # no concats, no OOB hazard: out-of-range perm entries just yield a zero row).
    cols = jax.lax.broadcasted_iota(jnp.int32, (L, L), 1)
    pmat = (cols == perm_ref[...]).astype(jnp.float32)                    # (L, L)
    cw_perm = jnp.dot(pmat, cw, preferred_element_type=jnp.float32)       # (L, D)
    bias = b_ref[...]                                                      # (1, 1)
    # DGI bilinear convention for disc(original, C, C[perm]): score_i = h_i^T W summary_i.
    out_ref[:, 0:1] = jnp.sum(cw * orig, axis=-1, keepdims=True) + bias   # pos
    out_ref[:, 1:2] = jnp.sum(cw_perm * orig, axis=-1, keepdims=True) + bias  # neg


def edge_disc_forward(c, original, disc_w, perm, disc_b):
    """c/original: (L, D) f32, disc_w: (D, D), perm: (L,) int, disc_b: (1,) -> (L, 2)."""
    L, _ = c.shape
    return pl.pallas_call(
        _edge_disc_kernel,
        out_shape=jax.ShapeDtypeStruct((L, 2), jnp.float32),
        in_specs=[pl.BlockSpec(memory_space=pltpu.MemorySpace.VMEM)] * 5,
        out_specs=pl.BlockSpec(memory_space=pltpu.MemorySpace.VMEM),
        # TODO(synk): for very large L, tile over L and gather (C@W)[perm] with a
        # scalar-prefetch index_map instead of an (L,L) one-hot matmul.
    )(c, original, disc_w, perm.reshape(L, 1).astype(jnp.int32),
      disc_b.reshape(1, 1).astype(jnp.float32))


# --------------------------------------------------------------------------
# Kernel 3: CNN conv branch (Conv1d(D,D,k=2) + ReLU + MaxPool1d(S-1)), tiled over B.
# --------------------------------------------------------------------------
def _cnn_conv_kernel(x_ref, w0_ref, w1_ref, b_ref, o_ref):
    x = x_ref[...].astype(jnp.float32)                          # (TB, S, D)
    TB, S, D = x.shape
    w0 = jnp.broadcast_to(w0_ref[...], (TB, D, D))
    w1 = jnp.broadcast_to(w1_ref[...], (TB, D, D))
    # 2-tap conv as two batched dots: y[b,t] = x[b,t] @ W0 + x[b,t+1] @ W1 + b
    y = (jnp.einsum('bsd,bdf->bsf', x[:, :S - 1, :], w0,
                    preferred_element_type=jnp.float32)
         + jnp.einsum('bsd,bdf->bsf', x[:, 1:, :], w1,
                      preferred_element_type=jnp.float32)
         + b_ref[...])                                          # (TB, S-1, D)
    y = jnp.maximum(y, 0.0)                                     # ReLU
    o_ref[...] = jnp.max(y, axis=1)                             # MaxPool over full window


def cnn_forward(x, conv_w, conv_b):
    """Mirrors CNN.forward.  x: (B, S, D), conv_w: (D_out, D_in, 2), conv_b: (D,)."""
    if min(x.shape) <= 1:
        if min(x.shape) == 0:
            return jnp.zeros((1, x.shape[-1]), jnp.float32)
        xs = jnp.squeeze(x, 0) if x.shape[0] == 1 else x
        return jnp.max(xs, axis=0)                              # torch.max(x, dim=0)[0]
    B, S, D = x.shape
    # Conv1d cross-correlation taps, transposed to (D_in, D_out) for x @ W.
    w0 = conv_w[:, :, 0].T
    w1 = conv_w[:, :, 1].T
    tb = _pick_tile(B, S * D * x.dtype.itemsize)
    out = pl.pallas_call(
        _cnn_conv_kernel,
        out_shape=jax.ShapeDtypeStruct((B, D), jnp.float32),
        grid=(B // tb,),
        in_specs=[
            pl.BlockSpec((tb, S, D), lambda b: (b, 0, 0)),
            pl.BlockSpec((D, D), lambda b: (0, 0)),
            pl.BlockSpec((D, D), lambda b: (0, 0)),
            pl.BlockSpec((1, D), lambda b: (0, 0)),
        ],
        out_specs=pl.BlockSpec((tb, D), lambda b: (b, 0)),
        compiler_params=pltpu.CompilerParams(
            dimension_semantics=("parallel",)),                 # B across TCs on v7x
    )(x, w0, w1, conv_b.reshape(1, D))
    return out                                                  # x.view(x.size(0), -1)


# --------------------------------------------------------------------------
# EdgeSearch
# --------------------------------------------------------------------------
class EdgeSearchPallas:
    def __init__(self, key, num_primitives, l_dim, model_type="darts"):
        k0, k1, k2, k3 = jax.random.split(key, 4)
        self.l_dim = l_dim
        # _initialize_alphas (darts): 0.001 * randn(1, P); edge_alphas = softmax(-1)
        self.log_edge_alphas = 0.001 * jax.random.normal(k0, (1, num_primitives), jnp.float32)
        self.edge_alphas = jax.nn.softmax(self.log_edge_alphas, axis=-1)
        # edge_alphas is fixed at construction: do the argmax -> host int ONCE here so
        # forward() never blocks dispatch behind a device->host sync.
        self.edge_idx = int(jnp.argmax(self.edge_alphas, axis=-1)[0])
        self.gene_edge = EDGE_PRIMITIVES[self.edge_idx]
        self._weights = self.edge_alphas[0]                     # (P,) f32
        # CNN params: nn.Conv1d(l_dim, l_dim, kernel_size=2)
        bound = 1.0 / jnp.sqrt(jnp.float32(l_dim * 2))
        self.conv_w = jax.random.uniform(k1, (l_dim, l_dim, 2), jnp.float32, -bound, bound)
        self.conv_b = jax.random.uniform(k2, (l_dim,), jnp.float32, -bound, bound)
        # Discriminator: nn.Bilinear(l_dim, l_dim, 1)
        self.disc_w = jax.random.uniform(k3, (l_dim, l_dim), jnp.float32, -bound, bound)
        self.disc_b = jnp.zeros((1,), jnp.float32)

    def forward(self, original, op_tensors, perm):
        """original: (L, D); op_tensors: (L, P, S, D); perm: (L,) int32 permutation."""
        # Kernel 1: pipelined, L-parallel max-over-S + alpha mix  -> C (L, D).
        c = edge_mix_forward(self._weights, op_tensors)
        # Kernel 2: single C@W matmul + one-hot perm gather + bilinear scores -> (L, 2).
        ret = edge_disc_forward(c, original, self.disc_w, perm, self.disc_b)
        # TODO(synk): EDGE_OPS[gene_edge](...) graph sub-sampling is undefined in the
        # source; edge_subs is the chosen-primitive slice of the synthesized op tensors.
        # The index is static (cached at __init__) but the slice is still pure HBM
        # traffic — for large L*S*D defer materialization to the consumer.
        edge_subs = op_tensors[:, self.edge_idx]
        return ret, self.gene_edge, edge_subs, op_tensors


if __name__ == "__main__":
    key = jax.random.PRNGKey(0)
    L, P, S, D = 3, len(EDGE_PRIMITIVES), 8, 32   # layers, primitives, sub_len, l_dim
    k_ops, k_orig, k_model, k_perm, k_cnn = jax.random.split(key, 5)

    op_tensors = jax.random.normal(k_ops, (L, P, S, D), jnp.float32)
    original = jax.random.normal(k_orig, (L, D), jnp.float32)
    perm = jax.random.permutation(k_perm, L).astype(jnp.int32)  # np.random.permutation stand-in

    model = EdgeSearchPallas(k_model, num_primitives=P, l_dim=D)
    ret, gene_edge, edge_subs, _ = model.forward(original, op_tensors, perm)
    jax.block_until_ready(ret)

    # Exercise the Conv1d+ReLU+MaxPool Pallas kernel (CNN conv branch, batch > 1).
    x_cnn = jax.random.normal(k_cnn, (2, S, D), jnp.float32)
    y_cnn = cnn_forward(x_cnn, model.conv_w, model.conv_b)
    jax.block_until_ready(y_cnn)

    assert ret.shape == (L, 2) and y_cnn.shape == (2, D)
    assert edge_subs.shape == (L, S, D) and gene_edge in EDGE_PRIMITIVES
    print("KERNEL_OK")
</pallas_src>

<mosaic_0001>
module attributes {stable_mosaic.version = 11 : i64} {
  func.func @_edge_mix_kernel(%arg0: i32, %arg1: i32, %arg2: memref<4x1xf32, #tpu.memory_space<vmem>>, %arg3: memref<3x4x8x32xf32, #tpu.memory_space<vmem>>, %arg4: memref<3x32xf32, #tpu.memory_space<vmem>>, %arg5: memref<3x4x32xf32, #tpu.memory_space<vmem>>) attributes {dimension_semantics = [#tpu.dimension_semantics<parallel>, #tpu.dimension_semantics<arbitrary>], iteration_bounds = array<i64: 1, 1>, scalar_prefetch = 0 : i64, scratch_operands = 1 : i64, tpu.core_type = #tpu.core_type<tc>, window_params = [{pipeline_mode = #tpu.pipeline_mode<synchronous>, transform_indices = @transform_0, window_bounds = array<i64: 4, 1>}, {transform_indices = @transform_1, window_bounds = array<i64: 3, 4, 8, 32>}, {transform_indices = @transform_2, window_bounds = array<i64: 3, 32>}]} {
    %c0_i32 = arith.constant 0 : i32
    %0 = arith.cmpi eq, %arg1, %c0_i32 : i32
    %1 = arith.extui %0 : i1 to i32
    %c0_i32_0 = arith.constant 0 : i32
    %2 = arith.cmpi ne, %1, %c0_i32_0 : i32
    scf.if %2 {
      %cst_12 = arith.constant 0xFF800000 : f32
      %11 = vector.broadcast %cst_12 : f32 to vector<3x4x32xf32>
      %c0_13 = arith.constant 0 : index
      %c0_14 = arith.constant 0 : index
      %c0_15 = arith.constant 0 : index
      %12 = vector.load %arg5[%c0_13, %c0_14, %c0_15] : memref<3x4x32xf32, #tpu.memory_space<vmem>>, vector<3x4x32xf32>
      tpu.vector_store %arg5[%c0_13, %c0_14, %c0_15], %11 {strides = array<i32>} : memref<3x4x32xf32, #tpu.memory_space<vmem>>, vector<3x4x32xf32>,
    } else {
    }
    %c0 = arith.constant 0 : index
    %c0_1 = arith.constant 0 : index
    %c0_2 = arith.constant 0 : index
    %c0_3 = arith.constant 0 : index
    %3 = vector.load %arg3[%c0, %c0_1, %c0_2, %c0_3] : memref<3x4x8x32xf32, #tpu.memory_space<vmem>>, vector<3x4x8x32xf32>
    %c0_4 = arith.constant 0 : index
    %c0_5 = arith.constant 0 : index
    %c0_6 = arith.constant 0 : index
    %4 = vector.load %arg5[%c0_4, %c0_5, %c0_6] : memref<3x4x32xf32, #tpu.memory_space<vmem>>, vector<3x4x32xf32>
    %cst = arith.constant dense<0xFF800000> : vector<3x4x32xf32>
    %5 = vector.multi_reduction <maximumf>, %3, %cst [2] : vector<3x4x8x32xf32> to vector<3x4x32xf32>
    %6 = arith.maximumf %4, %5 : vector<3x4x32xf32>
    %c0_7 = arith.constant 0 : index
    %c0_8 = arith.constant 0 : index
    %c0_9 = arith.constant 0 : index
    %7 = vector.load %arg5[%c0_7, %c0_8, %c0_9] : memref<3x4x32xf32, #tpu.memory_space<vmem>>, vector<3x4x32xf32>
    tpu.vector_store %arg5[%c0_7, %c0_8, %c0_9], %6 {strides = array<i32>} : memref<3x4x32xf32, #tpu.memory_space<vmem>>, vector<3x4x32xf32>,
    %c0_i32_10 = arith.constant 0 : i32
    %8 = arith.cmpi eq, %arg1, %c0_i32_10 : i32
    %9 = arith.extui %8 : i1 to i32
    %c0_i32_11 = arith.constant 0 : i32
    %10 = arith.cmpi ne, %9, %c0_i32_11 : i32
    scf.if %10 {
      %c0_12 = arith.constant 0 : index
      %c0_13 = arith.constant 0 : index
      %c0_14 = arith.constant 0 : index
      %11 = vector.load %arg5[%c0_12, %c0_13, %c0_14] : memref<3x4x32xf32, #tpu.memory_space<vmem>>, vector<3x4x32xf32>
      %c0_15 = arith.constant 0 : index
      %c0_16 = arith.constant 0 : index
      %12 = vector.load %arg2[%c0_15, %c0_16] : memref<4x1xf32, #tpu.memory_space<vmem>>, vector<4x1xf32>
      %13 = vector.shape_cast %12 : vector<4x1xf32> to vector<1x4x1xf32>
      %14 = vector.broadcast %13 : vector<1x4x1xf32> to vector<3x4x32xf32>
      %15 = arith.mulf %11, %14 : vector<3x4x32xf32>
      %cst_17 = arith.constant dense<0.000000e+00> : vector<3x32xf32>
      %16 = vector.multi_reduction <add>, %15, %cst_17 [1] : vector<3x4x32xf32> to vector<3x32xf32>
      %c0_18 = arith.constant 0 : index
      %c0_19 = arith.constant 0 : index
      %17 = vector.load %arg4[%c0_18, %c0_19] : memref<3x32xf32, #tpu.memory_space<vmem>>, vector<3x32xf32>
      tpu.vector_store %arg4[%c0_18, %c0_19], %16 {strides = array<i32>} : memref<3x32xf32, #tpu.memory_space<vmem>>, vector<3x32xf32>,
    } else {
    }
    return
  }
  func.func @transform_0(%arg0: i32, %arg1: i32) -> (i32, i32) {
    %c0_i32 = arith.constant 0 : i32
    %c0_i32_0 = arith.constant 0 : i32
    %c0_i32_1 = arith.constant 0 : i32
    return %c0_i32, %c0_i32_0 : i32, i32
  }
  func.func @transform_1(%arg0: i32, %arg1: i32) -> (i32, i32, i32, i32) {
    %c0_i32 = arith.constant 0 : i32
    %c0_i32_0 = arith.constant 0 : i32
    %c0_i32_1 = arith.constant 0 : i32
    return %arg0, %c0_i32, %arg1, %c0_i32_0 : i32, i32, i32, i32
  }
  func.func @transform_2(%arg0: i32, %arg1: i32) -> (i32, i32) {
    %c0_i32 = arith.constant 0 : i32
    %c0_i32_0 = arith.constant 0 : i32
    return %arg0, %c0_i32 : i32, i32
  }
}

</mosaic_0001>

<llo_original>
// kernel: tpu_custom_call.1
$region0: #{tpu_custom_call.1}
  #allocation0 [shape = 'u32[]', space=smem, size = 0x4, offset = 0x4, fixed_abs, tag = 'smem constant byte address 0x4 - core index']
  #allocation1 [shape = 'u32[144,128]{1,0:T(1,128)}', space=vmem, size = 0x12000, scoped, tag = 'internal scratch']
  #allocation2 [shape = 'f32[3,4,32]{2,1,0:T(4,128)}', space=vmem, size = 0x1800, scoped, tag = 'scratch operand']
  %s0 = inlined_call_operand.vmem [shape: f32[4,1], index: 0, kind: input, shape index: {}]
  %s1 = inlined_call_operand.hbm [shape: f32[3,4,8,32], index: 1, kind: input, shape index: {}]
  %s2 = inlined_call_operand.hbm [shape: f32[3,32], index: 2, kind: output, shape index: {}]
  %s3 = sld [smem:[#allocation0]]
  $region30: #{tpu_custom_call.1} parent=0
    _
  %s5 = ssub.s32 1, %s3
  %s6 = scalar_select 0, %s5, %s3
  $region1: #{tpu_custom_call.1} parent=0
    #allocation3 [shape = 'u8[49152]{0}', space=vmem, size = 0xc000, scoped, tag = 'input window, operand 1, single buffered']
    #allocation4 [shape = 's32[1]{0}', space=sflag, size = 0x4, scoped, tag = 'scoped memory for tpu_custom_call.1']
    #allocation5 [shape = 's32[1]{0}', space=sflag, size = 0x4, scoped, tag = 'scoped memory for tpu_custom_call.1']
    #allocation6 [shape = 'u8[2048]{0}', space=vmem, size = 0x800, scoped, tag = 'output window, operand 0, single buffered']
    %7 = vsyncpa [#allocation4], 0
    %8 = vsyncpa [#allocation5], 0
    // Predicated region
    $region2: #{tpu_custom_call.1} parent=1 // pred_check
      _
    $region3: #{tpu_custom_call.1} parent=1 // pred_check_branch
      %10 = sbr.rel (0) target = $region5
    $region4: #{tpu_custom_call.1} parent=1 // pred_region
      _
    $region5: #{tpu_custom_call.1} parent=1 // pred_fallthru
      _
    // Predicated region
    $region6: #{tpu_custom_call.1} parent=1 // pred_check
      _
    $region7: #{tpu_custom_call.1} parent=1 // pred_check_branch
      %12 = sbr.rel (0) target = $region9
    $region8: #{tpu_custom_call.1} parent=1 // pred_region
      %s14 = ssub.s32 1536, 1536
      %15 = vsyncadd [#allocation4], %s14
      %s16 = sshll.u32 [#allocation3], 4
      %s17 = int_to_ptr.vmem [resolvable:$true] %s16
      %22 = dma.hbm_to_vmem [thread:$0]  %s1, 1536, %s17, [#allocation4], 128, 128, 8
    $region9: #{tpu_custom_call.1} parent=1 // pred_fallthru
      _
    // Predicated region
    $region10: #{tpu_custom_call.1} parent=1 // pred_check
      _
    $region11: #{tpu_custom_call.1} parent=1 // pred_check_branch
      %24 = sbr.rel (0) target = $region13
    $region12: #{tpu_custom_call.1} parent=1 // pred_region
      %25 = dma.done [#allocation4], 1536
    $region13: #{tpu_custom_call.1} parent=1 // pred_fallthru
      _
    %p26 = scmp.eq.s32.totalorder 0, 0
    // Predicated region
    $region14: #{tpu_custom_call.1} parent=1 // pred_check
      %p27 = pneg %p26
    $region15: #{tpu_custom_call.1} parent=1 // pred_check_branch
      %29 = sbr.rel (%p27) target = $region17
    $region16: #{tpu_custom_call.1} parent=1 // pred_region
      %vm30 = vcmask 257024
      %31 = vst.msk [vmem:[#allocation2] sm:$0xf] %vm30, -inf
      %32 = vst.msk [vmem:[#allocation2 + $0x4] sm:$0xf] %vm30, -inf
      %33 = vst.msk [vmem:[#allocation2 + $0x8] sm:$0xf] %vm30, -inf
    $region17: #{tpu_custom_call.1} parent=1 // pred_fallthru
      _
    %v34 = vld [vmem:[#allocation3] sm:$0xff]
    %v35 = vld [vmem:[#allocation3 + $0x8] sm:$0xff]
    %v36 = vld [vmem:[#allocation3 + $0x10] sm:$0xff]
    %v37 = vld [vmem:[#allocation3 + $0x18] sm:$0xff]
    %v38 = vld [vmem:[#allocation3 + $0x20] sm:$0xff]
    %v39 = vld [vmem:[#allocation3 + $0x28] sm:$0xff]
    %v40 = vld [vmem:[#allocation3 + $0x30] sm:$0xff]
    %v41 = vld [vmem:[#allocation3 + $0x38] sm:$0xff]
    %v42 = vld [vmem:[#allocation3 + $0x40] sm:$0xff]
    %v43 = vld [vmem:[#allocation3 + $0x48] sm:$0xff]
    %v44 = vld [vmem:[#allocation3 + $0x50] sm:$0xff]
    %v45 = vld [vmem:[#allocation3 + $0x58] sm:$0xff]
    %v46 = vld [vmem:[#allocation2] sm:$0xf]
    %v47 = vld [vmem:[#allocation2 + $0x4] sm:$0xf]
    %v48 = vld [vmem:[#allocation2 + $0x8] sm:$0xf]
    %vm49 = vcmask 261120
    %v50 = vsel %vm49, %v34, -inf
    %v51 = vrot.slane %v50, 4
    %v52 = vmax.f32 %v50, %v51
    %v53 = vrot.slane %v52, 2
    %v54 = vmax.f32 %v52, %v53
    %v55 = vrot.slane %v54, 1
    %v56 = vmax.f32 %v54, %v55
    %v57 = vsel %vm49, %v35, -inf
    %v58 = vrot.slane %v57, 4
    %v59 = vmax.f32 %v57, %v58
    %v60 = vrot.slane %v59, 2
    %v61 = vmax.f32 %v59, %v60
    %v62 = vrot.slane %v61, 1
    %v63 = vmax.f32 %v61, %v62
    %v64 = vsel %vm49, %v36, -inf
    %v65 = vrot.slane %v64, 4
    %v66 = vmax.f32 %v64, %v65
    %v67 = vrot.slane %v66, 2
    %v68 = vmax.f32 %v66, %v67
    %v69 = vrot.slane %v68, 1
    %v70 = vmax.f32 %v68, %v69
    %v71 = vsel %vm49, %v37, -inf
    %v72 = vrot.slane %v71, 4
    %v73 = vmax.f32 %v71, %v72
    %v74 = vrot.slane %v73, 2
    %v75 = vmax.f32 %v73, %v74
    %v76 = vrot.slane %v75, 1
    %v77 = vmax.f32 %v75, %v76
    %v78 = vsel %vm49, %v38, -inf
    %v79 = vrot.slane %v78, 4
    %v80 = vmax.f32 %v78, %v79
    %v81 = vrot.slane %v80, 2
    %v82 = vmax.f32 %v80, %v81
    %v83 = vrot.slane %v82, 1
    %v84 = vmax.f32 %v82, %v83
    %v85 = vsel %vm49, %v39, -inf
    %v86 = vrot.slane %v85, 4
    %v87 = vmax.f32 %v85, %v86
    %v88 = vrot.slane %v87, 2
    %v89 = vmax.f32 %v87, %v88
    %v90 = vrot.slane %v89, 1
    %v91 = vmax.f32 %v89, %v90
    %v92 = vsel %vm49, %v40, -inf
    %v93 = vrot.slane %v92, 4
    %v94 = vmax.f32 %v92, %v93
    %v95 = vrot.slane %v94, 2
    %v96 = vmax.f32 %v94, %v95
    %v97 = vrot.slane %v96, 1
    %v98 = vmax.f32 %v96, %v97
    %v99 = vsel %vm49, %v41, -inf
    %v100 = vrot.slane %v99, 4
    %v101 = vmax.f32 %v99, %v100
    %v102 = vrot.slane %v101, 2
    %v103 = vmax.f32 %v101, %v102
    %v104 = vrot.slane %v103, 1
    %v105 = vmax.f32 %v103, %v104
    %v106 = vsel %vm49, %v42, -inf
    %v107 = vrot.slane %v106, 4
    %v108 = vmax.f32 %v106, %v107
    %v109 = vrot.slane %v108, 2
    %v110 = vmax.f32 %v108, %v109
    %v111 = vrot.slane %v110, 1
    %v112 = vmax.f32 %v110, %v111
    %v113 = vsel %vm49, %v43, -inf
    %v114 = vrot.slane %v113, 4
    %v115 = vmax.f32 %v113, %v114
    %v116 = vrot.slane %v115, 2
    %v117 = vmax.f32 %v115, %v116
    %v118 = vrot.slane %v117, 1
    %v119 = vmax.f32 %v117, %v118
    %v120 = vsel %vm49, %v44, -inf
    %v121 = vrot.slane %v120, 4
    %v122 = vmax.f32 %v120, %v121
    %v123 = vrot.slane %v122, 2
    %v124 = vmax.f32 %v122, %v123
    %v125 = vrot.slane %v124, 1
    %v126 = vmax.f32 %v124, %v125
    %v127 = vsel %vm49, %v45, -inf
    %v128 = vrot.slane %v127, 4
    %v129 = vmax.f32 %v127, %v128
    %v130 = vrot.slane %v129, 2
    %v131 = vmax.f32 %v129, %v130
    %v132 = vrot.slane %v131, 1
    %v133 = vmax.f32 %v131, %v132
    %vm146 = vcmask 1041409
    %v147 = vsel %vm146, %v63, %v56
    %vm148 = vcmask 1042434
    %v149 = vsel %vm148, %v70, %v147
    %vm150 = vcmask 1043459
    %v151 = vsel %vm150, %v77, %v149
    %v152 = vsel %vm146, %v91, %v84
    %v153 = vsel %vm148, %v98, %v152
    %v154 = vsel %vm150, %v105, %v153
    %v155 = vsel %vm146, %v119, %v112
    %v156 = vsel %vm148, %v126, %v155
    %v157 = vsel %vm150, %v133, %v156
    %v161 = vmax.f32 %v46, %v151
    %v162 = vmax.f32 %v47, %v154
    %v163 = vmax.f32 %v48, %v157
    %vm164 = vcmask 257024
    %165 = vst.msk [vmem:[#allocation2] sm:$0xf] %vm164, %v161
    %166 = vst.msk [vmem:[#allocation2 + $0x4] sm:$0xf] %vm164, %v162
    %167 = vst.msk [vmem:[#allocation2 + $0x8] sm:$0xf] %vm164, %v163
    // Predicated region
    $region18: #{tpu_custom_call.1} parent=1 // pred_check
      %p168 = pneg %p26
    $region19: #{tpu_custom_call.1} parent=1 // pred_check_branch
      %170 = sbr.rel (%p168) target = $region21
    $region20: #{tpu_custom_call.1} parent=1 // pred_region
      %v171 = vld [vmem:[#allocation2] sm:$0xf]
      %v172 = vld [vmem:[#allocation2 + $0x4] sm:$0xf]
      %v173 = vld [vmem:[#allocation2 + $0x8] sm:$0xf]
      %v174 = vld [vmem:[%s0] sm:$0xf]
      %176 = vset.pattern.permute.xlu0 0
      %177 = vperm.xlu0 %176, %v174
      %v178 = vpop.permute.xlu0 %177
      %v180 = vmul.f32 %v171, %v178
      %v181 = vmul.f32 %v172, %v178
      %v182 = vmul.f32 %v173, %v178
      %v183 = vsel %vm164, %v180, 0.0
      %v184 = vrot.slane %v183, 4
      %v185 = vadd.f32 %v183, %v184
      %v186 = vrot.slane %v185, 2
      %v187 = vadd.f32 %v185, %v186
      %v188 = vrot.slane %v187, 1
      %v189 = vadd.f32 %v187, %v188
      %v190 = vsel %vm164, %v181, 0.0
      %v191 = vrot.slane %v190, 4
      %v192 = vadd.f32 %v190, %v191
      %v193 = vrot.slane %v192, 2
      %v194 = vadd.f32 %v192, %v193
      %v195 = vrot.slane %v194, 1
      %v196 = vadd.f32 %v194, %v195
      %v197 = vsel %vm164, %v182, 0.0
      %v198 = vrot.slane %v197, 4
      %v199 = vadd.f32 %v197, %v198
      %v200 = vrot.slane %v199, 2
      %v201 = vadd.f32 %v199, %v200
      %v202 = vrot.slane %v201, 1
      %v203 = vadd.f32 %v201, %v202
      %v207 = vsel %vm146, %v196, %v189
      %v208 = vsel %vm148, %v203, %v207
      %vm210 = vcmask 256000
      %211 = vst.msk [vmem:[#allocation6] sm:$0x7] %vm210, %v208
    $region21: #{tpu_custom_call.1} parent=1 // pred_fallthru
      _
    // Predicated region
    $region22: #{tpu_custom_call.1} parent=1 // pred_check
      _
    $region23: #{tpu_custom_call.1} parent=1 // pred_check_branch
      %213 = sbr.rel (0) target = $region25
    $region24: #{tpu_custom_call.1} parent=1 // pred_region
      %s215 = ssub.s32 64, 64
      %216 = vsyncadd [#allocation5], %s215
      %s218 = sshll.u32 [#allocation6], 4
      %s219 = int_to_ptr.vmem [resolvable:$true] %s218
      %221 = dma.vmem_to_hbm [thread:$0]  %s219, 64, %s2, [#allocation5]
    $region25: #{tpu_custom_call.1} parent=1 // pred_fallthru
      _
    // Predicated region
    $region26: #{tpu_custom_call.1} parent=1 // pred_check
      _
    $region27: #{tpu_custom_call.1} parent=1 // pred_check_branch
      %223 = sbr.rel (0) target = $region29
    $region28: #{tpu_custom_call.1} parent=1 // pred_region
      %224 = dma.done [#allocation5], 64
    $region29: #{tpu_custom_call.1} parent=1 // pred_fallthru
      _
    %225 = vsyncpa [#allocation4], 1
    %226 = vsyncpa [#allocation5], 1

</llo_original>
